<compile_context>
chip_gen: v7x
topology: tpu7x:2x2x1
jax: 0.10.0
libtpu: 0.0.40
codegen_flags: <defaults>
</compile_context>

<pallas_src>
import functools

import jax
import jax.numpy as jnp
from jax import lax
from jax.experimental import pallas as pl
from jax.experimental.pallas import tpu as pltpu


def _pair(v):
    return tuple(v) if isinstance(v, (tuple, list)) else (v, v)


def _softpool2d_kernel(x_ref, o_ref, *, ch, h, w, h_out, w_out,
                       kh, kw, sh, sw, ph, pw):
    f32 = jnp.float32
    bt = x_ref.shape[0]          # static batch tile

    # 0/1 window-selection matrices, built once per grid step (VPU iota+cmp).
    #   pool_w[w, j]  = 1  iff input col w lies inside output window j
    #   pool_hT[i, h] = 1  iff input row h lies inside output window i
    # Padded positions simply have no row/col here, so they contribute 0 to
    # both pooled sums — exactly PyTorch's zero-padded avg_pool2d semantics.
    col = lax.broadcasted_iota(jnp.int32, (w, w_out), 0)
    jwin = lax.broadcasted_iota(jnp.int32, (w, w_out), 1)
    wlo = jwin * sw - pw
    pool_w = ((col >= wlo) & (col < wlo + kw)).astype(f32)        # (W, Wout)

    iwin = lax.broadcasted_iota(jnp.int32, (h_out, h), 0)
    row = lax.broadcasted_iota(jnp.int32, (h_out, h), 1)
    hlo = iwin * sh - ph
    pool_hT = ((row >= hlo) & (row < hlo + kh)).astype(f32)       # (Hout, H)

    def sum_pool(field):                                          # (H, W) -> (Hout, Wout)
        t = jnp.dot(field, pool_w, preferred_element_type=f32)    # MXU, contract W (lanes)
        return jnp.dot(pool_hT, t, preferred_element_type=f32)    # MXU, contract H

    for b in range(bt):          # static, small (capped) batch tile
        # e(h, w) = sum_c exp(x[b, c, h, w]).  C is a non-vreg axis, so this
        # is one EUP exp + one VPU add per channel (no XLU lane reduction),
        # and only a single (H, W) f32 field stays live.  Input stays in its
        # original dtype through the DMA; upcast happens per channel here.
        def accum_e(c, acc, b=b):
            return acc + jnp.exp(x_ref[b, c].astype(f32))
        e = lax.fori_loop(0, ch, accum_e, jnp.zeros((h, w), f32))

        den = sum_pool(e)                                         # (Hout, Wout), > 0
        r = pl.reciprocal(den, approx=True)                       # EUP approx ...
        inv_den = r * (2.0 - den * r)                             # ... + 1 Newton step (VPU)

        @pl.loop(0, ch)
        def _per_channel(c, b=b, e=e, inv_den=inv_den):
            num = sum_pool(x_ref[b, c].astype(f32) * e)
            o_ref[b, c] = (num * inv_den).astype(o_ref.dtype)


def soft_pool2d(x, kernel_size, stride=None, padding=0):
    """SoftPool2d forward. x: (N, C, H, W) -> (N, C, Hout, Wout)."""
    kh, kw = _pair(kernel_size)
    sh, sw = _pair(kernel_size if stride is None else stride)
    ph, pw = _pair(padding)

    n, ch, h, w = x.shape
    h_out = (h + 2 * ph - kh) // sh + 1
    w_out = (w + 2 * pw - kw) // sw + 1

    # Batch-tile small images so a grid step moves a useful amount of data
    # (per-step overhead ~0.35us) while staying well inside VMEM.  bt divides
    # n so every block is full; capped so the static unroll stays small.
    itemsize = jnp.dtype(x.dtype).itemsize
    per_img_in = ch * h * w * itemsize
    per_img_out = ch * h_out * w_out * itemsize
    bt = 1
    for d in range(1, min(n, 8) + 1):
        if n % d == 0 and d * per_img_in <= (4 << 20):
            bt = d
            if bt * per_img_in >= (512 << 10):
                break

    kernel = functools.partial(
        _softpool2d_kernel, ch=ch, h=h, w=w, h_out=h_out, w_out=w_out,
        kh=kh, kw=kw, sh=sh, sw=sw, ph=ph, pw=pw)

    # in/out double buffers + f32 intermediates (e, pooled fields, selection
    # matrices) + slack; never below the 32 MiB default scoped limit.
    vmem_need = (2 * bt * per_img_in + 2 * bt * per_img_out
                 + 8 * h * w * 4 + (4 << 20))
    vmem_limit = int(min(max(vmem_need, 32 << 20), 96 << 20))

    return pl.pallas_call(
        kernel,
        out_shape=jax.ShapeDtypeStruct((n, ch, h_out, w_out), x.dtype),
        grid=(n // bt,),
        in_specs=[pl.BlockSpec((bt, ch, h, w), lambda b: (b, 0, 0, 0))],
        out_specs=pl.BlockSpec((bt, ch, h_out, w_out), lambda b: (b, 0, 0, 0)),
        compiler_params=pltpu.CompilerParams(
            dimension_semantics=("parallel",),
            vmem_limit_bytes=vmem_limit),
    )(x)


class SoftPool2d:
    """Mirror of the PyTorch module (no parameters)."""

    def __init__(self, kernel_size, stride, padding=0):
        self.kernel_size = kernel_size
        self.stride = stride
        self.padding = padding

    def __call__(self, x):
        return soft_pool2d(x, self.kernel_size, self.stride, self.padding)


def _softpool2d_reference(x, kernel_size, stride, padding):
    """Pure-JAX reference mirroring the PyTorch formula (zero-padded pools)."""
    kh, kw = _pair(kernel_size)
    sh, sw = _pair(stride)
    ph, pw = _pair(padding)
    xf = x.astype(jnp.float32)
    e = jnp.sum(jnp.exp(xf), axis=1, keepdims=True)

    def spool(v):
        return lax.reduce_window(
            v, 0.0, lax.add,
            window_dimensions=(1, 1, kh, kw),
            window_strides=(1, 1, sh, sw),
            padding=((0, 0), (0, 0), (ph, ph), (pw, pw)))

    return (spool(xf * e) / spool(e)).astype(x.dtype)


if __name__ == "__main__":
    key = jax.random.PRNGKey(0)
    x = jax.random.normal(key, (2, 4, 16, 16), dtype=jnp.float32)

    # Case 1: typical config (kernel=2, stride=2, no padding).
    pool = SoftPool2d(kernel_size=2, stride=2, padding=0)
    out = jax.block_until_ready(pool(x))
    assert out.shape == (2, 4, 8, 8), out.shape
    ref = _softpool2d_reference(x, 2, 2, 0)
    # Tolerance covers the approx-reciprocal fast path and any reduced-
    # precision MXU passes; genuine bugs show up as O(1) errors.
    assert jnp.allclose(out, ref, atol=1e-2, rtol=1e-2), \
        float(jnp.max(jnp.abs(out - ref)))

    # Case 2: padding + overlapping windows (exercises the in-kernel
    # zero-padding handling, which now matches PyTorch exactly).
    pool2 = SoftPool2d(kernel_size=3, stride=2, padding=1)
    out2 = jax.block_until_ready(pool2(x))
    ref2 = _softpool2d_reference(x, 3, 2, 1)
    assert out2.shape == ref2.shape == (2, 4, 8, 8), (out2.shape, ref2.shape)
    assert jnp.allclose(out2, ref2, atol=1e-2, rtol=1e-2), \
        float(jnp.max(jnp.abs(out2 - ref2)))

    print("KERNEL_OK")
</pallas_src>

<mosaic_0001>
module attributes {stable_mosaic.version = 11 : i64} {
  func.func @_softpool2d_kernel(%arg0: i32, %arg1: memref<2x4x16x16xf32, #tpu.memory_space<vmem>>, %arg2: memref<2x4x8x8xf32, #tpu.memory_space<vmem>>) attributes {dimension_semantics = [#tpu.dimension_semantics<parallel>], iteration_bounds = array<i64: 1>, scalar_prefetch = 0 : i64, scratch_operands = 0 : i64, tpu.core_type = #tpu.core_type<tc>, window_params = [{transform_indices = @transform_0, window_bounds = array<i64: 2, 4, 16, 16>}, {transform_indices = @transform_1, window_bounds = array<i64: 2, 4, 8, 8>}]} {
    %0 = tpu.iota {dimensions = array<i32: 0>} : vector<16x8xi32>
    %1 = tpu.iota {dimensions = array<i32: 1>} : vector<16x8xi32>
    %c2_i32 = arith.constant 2 : i32
    %2 = vector.broadcast %c2_i32 : i32 to vector<16x8xi32>
    %3 = arith.muli %1, %2 : vector<16x8xi32>
    %c0_i32 = arith.constant 0 : i32
    %4 = vector.broadcast %c0_i32 : i32 to vector<16x8xi32>
    %5 = arith.subi %3, %4 : vector<16x8xi32>
    %6 = arith.cmpi sge, %0, %5 : vector<16x8xi32>
    %c2_i32_0 = arith.constant 2 : i32
    %7 = vector.broadcast %c2_i32_0 : i32 to vector<16x8xi32>
    %8 = arith.addi %5, %7 : vector<16x8xi32>
    %9 = arith.cmpi slt, %0, %8 : vector<16x8xi32>
    %10 = arith.andi %6, %9 : vector<16x8xi1>
    %11 = arith.extui %10 : vector<16x8xi1> to vector<16x8xi32>
    %12 = arith.sitofp %11 : vector<16x8xi32> to vector<16x8xf32>
    %13 = tpu.iota {dimensions = array<i32: 0>} : vector<8x16xi32>
    %14 = tpu.iota {dimensions = array<i32: 1>} : vector<8x16xi32>
    %c2_i32_1 = arith.constant 2 : i32
    %15 = vector.broadcast %c2_i32_1 : i32 to vector<8x16xi32>
    %16 = arith.muli %13, %15 : vector<8x16xi32>
    %c0_i32_2 = arith.constant 0 : i32
    %17 = vector.broadcast %c0_i32_2 : i32 to vector<8x16xi32>
    %18 = arith.subi %16, %17 : vector<8x16xi32>
    %19 = arith.cmpi sge, %14, %18 : vector<8x16xi32>
    %c2_i32_3 = arith.constant 2 : i32
    %20 = vector.broadcast %c2_i32_3 : i32 to vector<8x16xi32>
    %21 = arith.addi %18, %20 : vector<8x16xi32>
    %22 = arith.cmpi slt, %14, %21 : vector<8x16xi32>
    %23 = arith.andi %19, %22 : vector<8x16xi1>
    %24 = arith.extui %23 : vector<8x16xi1> to vector<8x16xi32>
    %25 = arith.sitofp %24 : vector<8x16xi32> to vector<8x16xf32>
    %cst = arith.constant 0.000000e+00 : f32
    %26 = vector.broadcast %cst : f32 to vector<16x16xf32>
    %c0_i32_4 = arith.constant 0 : i32
    %c4_i32 = arith.constant 4 : i32
    %27 = arith.addi %c0_i32_4, %c4_i32 : i32
    %c1_i32 = arith.constant 1 : i32
    %28 = scf.for %arg3 = %c0_i32_4 to %27 step %c1_i32 iter_args(%arg4 = %26) -> (vector<16x16xf32>)  : i32 {
      %c0 = arith.constant 0 : index
      %48 = arith.index_cast %arg3 : i32 to index
      %c0_25 = arith.constant 0 : index
      %c0_26 = arith.constant 0 : index
      %49 = vector.load %arg1[%c0, %48, %c0_25, %c0_26] : memref<2x4x16x16xf32, #tpu.memory_space<vmem>>, vector<1x1x16x16xf32>
      %50 = vector.shape_cast %49 : vector<1x1x16x16xf32> to vector<16x16xf32>
      %51 = math.exp %50 : vector<16x16xf32>
      %52 = arith.addf %arg4, %51 : vector<16x16xf32>
      scf.yield %52 : vector<16x16xf32>
    }
    %c4_i32_5 = arith.constant 4 : i32
    %cst_6 = arith.constant dense<0.000000e+00> : vector<16x8xf32>
    %29 = tpu.matmul %28, %12, %cst_6 {dimension_numbers = #tpu.dot_dimension_numbers<[1], [0], [0], [1], [0, 0, 1, 1], [], []>} : vector<16x16xf32>, vector<16x8xf32>, vector<16x8xf32> -> vector<16x8xf32>
    %cst_7 = arith.constant dense<0.000000e+00> : vector<8x8xf32>
    %30 = tpu.matmul %25, %29, %cst_7 {dimension_numbers = #tpu.dot_dimension_numbers<[1], [0], [0], [1], [0, 0, 1, 1], [], []>} : vector<8x16xf32>, vector<16x8xf32>, vector<8x8xf32> -> vector<8x8xf32>
    %31 = tpu.reciprocal %30 {approx = true} : vector<8x8xf32> -> vector<8x8xf32>
    %32 = arith.mulf %30, %31 : vector<8x8xf32>
    %cst_8 = arith.constant 2.000000e+00 : f32
    %33 = vector.broadcast %cst_8 : f32 to vector<8x8xf32>
    %34 = arith.subf %33, %32 : vector<8x8xf32>
    %35 = arith.mulf %31, %34 : vector<8x8xf32>
    %c0_i32_9 = arith.constant 0 : i32
    %c4_i32_10 = arith.constant 4 : i32
    %36 = arith.addi %c0_i32_9, %c4_i32_10 : i32
    %c1_i32_11 = arith.constant 1 : i32
    scf.for %arg3 = %c0_i32_9 to %36 step %c1_i32_11  : i32 {
      %c1_i32_25 = arith.constant 1 : i32
      %48 = arith.muli %arg3, %c1_i32_25 : i32
      %c0_i32_26 = arith.constant 0 : i32
      %49 = arith.addi %c0_i32_26, %48 : i32
      %c0 = arith.constant 0 : index
      %50 = arith.index_cast %49 : i32 to index
      %c0_27 = arith.constant 0 : index
      %c0_28 = arith.constant 0 : index
      %51 = vector.load %arg1[%c0, %50, %c0_27, %c0_28] : memref<2x4x16x16xf32, #tpu.memory_space<vmem>>, vector<1x1x16x16xf32>
      %52 = vector.shape_cast %51 : vector<1x1x16x16xf32> to vector<16x16xf32>
      %53 = arith.mulf %52, %28 : vector<16x16xf32>
      %cst_29 = arith.constant dense<0.000000e+00> : vector<16x8xf32>
      %54 = tpu.matmul %53, %12, %cst_29 {dimension_numbers = #tpu.dot_dimension_numbers<[1], [0], [0], [1], [0, 0, 1, 1], [], []>} : vector<16x16xf32>, vector<16x8xf32>, vector<16x8xf32> -> vector<16x8xf32>
      %cst_30 = arith.constant dense<0.000000e+00> : vector<8x8xf32>
      %55 = tpu.matmul %25, %54, %cst_30 {dimension_numbers = #tpu.dot_dimension_numbers<[1], [0], [0], [1], [0, 0, 1, 1], [], []>} : vector<8x16xf32>, vector<16x8xf32>, vector<8x8xf32> -> vector<8x8xf32>
      %56 = arith.mulf %55, %35 : vector<8x8xf32>
      %c0_31 = arith.constant 0 : index
      %57 = arith.index_cast %49 : i32 to index
      %c0_32 = arith.constant 0 : index
      %c0_33 = arith.constant 0 : index
      %58 = vector.load %arg2[%c0_31, %57, %c0_32, %c0_33] : memref<2x4x8x8xf32, #tpu.memory_space<vmem>>, vector<1x1x8x8xf32>
      %59 = vector.shape_cast %58 : vector<1x1x8x8xf32> to vector<8x8xf32>
      %60 = vector.shape_cast %56 : vector<8x8xf32> to vector<1x1x8x8xf32>
      tpu.vector_store %arg2[%c0_31, %57, %c0_32, %c0_33], %60 {strides = array<i32>} : memref<2x4x8x8xf32, #tpu.memory_space<vmem>>, vector<1x1x8x8xf32>,
    }
    %c4_i32_12 = arith.constant 4 : i32
    %cst_13 = arith.constant 0.000000e+00 : f32
    %37 = vector.broadcast %cst_13 : f32 to vector<16x16xf32>
    %c0_i32_14 = arith.constant 0 : i32
    %c4_i32_15 = arith.constant 4 : i32
    %38 = arith.addi %c0_i32_14, %c4_i32_15 : i32
    %c1_i32_16 = arith.constant 1 : i32
    %39 = scf.for %arg3 = %c0_i32_14 to %38 step %c1_i32_16 iter_args(%arg4 = %37) -> (vector<16x16xf32>)  : i32 {
      %c1 = arith.constant 1 : index
      %48 = arith.index_cast %arg3 : i32 to index
      %c0 = arith.constant 0 : index
      %c0_25 = arith.constant 0 : index
      %49 = vector.load %arg1[%c1, %48, %c0, %c0_25] : memref<2x4x16x16xf32, #tpu.memory_space<vmem>>, vector<1x1x16x16xf32>
      %50 = vector.shape_cast %49 : vector<1x1x16x16xf32> to vector<16x16xf32>
      %51 = math.exp %50 : vector<16x16xf32>
      %52 = arith.addf %arg4, %51 : vector<16x16xf32>
      scf.yield %52 : vector<16x16xf32>
    }
    %c4_i32_17 = arith.constant 4 : i32
    %cst_18 = arith.constant dense<0.000000e+00> : vector<16x8xf32>
    %40 = tpu.matmul %39, %12, %cst_18 {dimension_numbers = #tpu.dot_dimension_numbers<[1], [0], [0], [1], [0, 0, 1, 1], [], []>} : vector<16x16xf32>, vector<16x8xf32>, vector<16x8xf32> -> vector<16x8xf32>
    %cst_19 = arith.constant dense<0.000000e+00> : vector<8x8xf32>
    %41 = tpu.matmul %25, %40, %cst_19 {dimension_numbers = #tpu.dot_dimension_numbers<[1], [0], [0], [1], [0, 0, 1, 1], [], []>} : vector<8x16xf32>, vector<16x8xf32>, vector<8x8xf32> -> vector<8x8xf32>
    %42 = tpu.reciprocal %41 {approx = true} : vector<8x8xf32> -> vector<8x8xf32>
    %43 = arith.mulf %41, %42 : vector<8x8xf32>
    %cst_20 = arith.constant 2.000000e+00 : f32
    %44 = vector.broadcast %cst_20 : f32 to vector<8x8xf32>
    %45 = arith.subf %44, %43 : vector<8x8xf32>
    %46 = arith.mulf %42, %45 : vector<8x8xf32>
    %c0_i32_21 = arith.constant 0 : i32
    %c4_i32_22 = arith.constant 4 : i32
    %47 = arith.addi %c0_i32_21, %c4_i32_22 : i32
    %c1_i32_23 = arith.constant 1 : i32
    scf.for %arg3 = %c0_i32_21 to %47 step %c1_i32_23  : i32 {
      %c1_i32_25 = arith.constant 1 : i32
      %48 = arith.muli %arg3, %c1_i32_25 : i32
      %c0_i32_26 = arith.constant 0 : i32
      %49 = arith.addi %c0_i32_26, %48 : i32
      %c1 = arith.constant 1 : index
      %50 = arith.index_cast %49 : i32 to index
      %c0 = arith.constant 0 : index
      %c0_27 = arith.constant 0 : index
      %51 = vector.load %arg1[%c1, %50, %c0, %c0_27] : memref<2x4x16x16xf32, #tpu.memory_space<vmem>>, vector<1x1x16x16xf32>
      %52 = vector.shape_cast %51 : vector<1x1x16x16xf32> to vector<16x16xf32>
      %53 = arith.mulf %52, %39 : vector<16x16xf32>
      %cst_28 = arith.constant dense<0.000000e+00> : vector<16x8xf32>
      %54 = tpu.matmul %53, %12, %cst_28 {dimension_numbers = #tpu.dot_dimension_numbers<[1], [0], [0], [1], [0, 0, 1, 1], [], []>} : vector<16x16xf32>, vector<16x8xf32>, vector<16x8xf32> -> vector<16x8xf32>
      %cst_29 = arith.constant dense<0.000000e+00> : vector<8x8xf32>
      %55 = tpu.matmul %25, %54, %cst_29 {dimension_numbers = #tpu.dot_dimension_numbers<[1], [0], [0], [1], [0, 0, 1, 1], [], []>} : vector<8x16xf32>, vector<16x8xf32>, vector<8x8xf32> -> vector<8x8xf32>
      %56 = arith.mulf %55, %46 : vector<8x8xf32>
      %c1_30 = arith.constant 1 : index
      %57 = arith.index_cast %49 : i32 to index
      %c0_31 = arith.constant 0 : index
      %c0_32 = arith.constant 0 : index
      %58 = vector.load %arg2[%c1_30, %57, %c0_31, %c0_32] : memref<2x4x8x8xf32, #tpu.memory_space<vmem>>, vector<1x1x8x8xf32>
      %59 = vector.shape_cast %58 : vector<1x1x8x8xf32> to vector<8x8xf32>
      %60 = vector.shape_cast %56 : vector<8x8xf32> to vector<1x1x8x8xf32>
      tpu.vector_store %arg2[%c1_30, %57, %c0_31, %c0_32], %60 {strides = array<i32>} : memref<2x4x8x8xf32, #tpu.memory_space<vmem>>, vector<1x1x8x8xf32>,
    }
    %c4_i32_24 = arith.constant 4 : i32
    return
  }
  func.func @transform_0(%arg0: i32) -> (i32, i32, i32, i32) {
    %c0_i32 = arith.constant 0 : i32
    %c0_i32_0 = arith.constant 0 : i32
    %c0_i32_1 = arith.constant 0 : i32
    %c0_i32_2 = arith.constant 0 : i32
    return %arg0, %c0_i32, %c0_i32_0, %c0_i32_1 : i32, i32, i32, i32
  }
  func.func @transform_1(%arg0: i32) -> (i32, i32, i32, i32) {
    %c0_i32 = arith.constant 0 : i32
    %c0_i32_0 = arith.constant 0 : i32
    %c0_i32_1 = arith.constant 0 : i32
    %c0_i32_2 = arith.constant 0 : i32
    return %arg0, %c0_i32, %c0_i32_0, %c0_i32_1 : i32, i32, i32, i32
  }
}

</mosaic_0001>

<llo_original>
// kernel: tpu_custom_call.1
$region0: #{tpu_custom_call.1}
  #allocation0 [shape = 'u32[]', space=smem, size = 0x4, offset = 0x4, fixed_abs, tag = 'smem constant byte address 0x4 - core index']
  #allocation1 [shape = 'u32[144,128]{1,0:T(1,128)}', space=vmem, size = 0x12000, scoped, tag = 'internal scratch']
  %s0 = inlined_call_operand.hbm [shape: f32[2,4,16,16], index: 0, kind: input, shape index: {}]
  %s1 = inlined_call_operand.hbm [shape: f32[2,4,8,8], index: 1, kind: output, shape index: {}]
  %s2 = sld [smem:[#allocation0]]
  $region46: #{tpu_custom_call.1} parent=0
    _
  %s4 = ssub.s32 1, %s2
  %s5 = scalar_select 0, %s4, %s2
  $region1: #{tpu_custom_call.1} parent=0
    #allocation2 [shape = 'u8[65536]{0}', space=vmem, size = 0x10000, scoped, tag = 'input window, operand 0, single buffered']
    #allocation3 [shape = 's32[1]{0}', space=sflag, size = 0x4, scoped, tag = 'scoped memory for tpu_custom_call.1']
    #allocation4 [shape = 's32[1]{0}', space=sflag, size = 0x4, scoped, tag = 'scoped memory for tpu_custom_call.1']
    #allocation5 [shape = 'u8[32768]{0}', space=vmem, size = 0x8000, scoped, tag = 'output window, operand 0, single buffered']
    %6 = vsyncpa [#allocation3], 0
    %7 = vsyncpa [#allocation4], 0
    // Predicated region
    $region2: #{tpu_custom_call.1} parent=1 // pred_check
      _
    $region3: #{tpu_custom_call.1} parent=1 // pred_check_branch
      %9 = sbr.rel (0) target = $region5
    $region4: #{tpu_custom_call.1} parent=1 // pred_region
      %s11 = ssub.s32 2048, 2048
      %12 = vsyncadd [#allocation3], %s11
      %s13 = sshll.u32 [#allocation2], 4
      %s14 = int_to_ptr.vmem [resolvable:$true] %s13
      %19 = dma.hbm_to_vmem [thread:$0]  %s0, 2048, %s14, [#allocation3], 128, 128, 8
    $region5: #{tpu_custom_call.1} parent=1 // pred_fallthru
      _
    // Predicated region
    $region6: #{tpu_custom_call.1} parent=1 // pred_check
      _
    $region7: #{tpu_custom_call.1} parent=1 // pred_check_branch
      %21 = sbr.rel (0) target = $region9
    $region8: #{tpu_custom_call.1} parent=1 // pred_region
      %22 = dma.done [#allocation3], 2048
    $region9: #{tpu_custom_call.1} parent=1 // pred_fallthru
      _
    %v23 = vlaneseq
    %v24 = vshrl.u32 %v23, 7
    %v25 = vadd.s32 %v24, 8
    %v26 = vlaneseq
    %v27 = vand.u32 %v26, 127
    %v28 = vmul.u32 %v27, 2
    %vm29 = vcmp.ge.s32.totalorder %v24, %v28
    %vm30 = vcmp.ge.s32.totalorder %v25, %v28
    %v31 = vadd.s32 %v28, 2
    %vm32 = vcmp.lt.s32.totalorder %v24, %v31
    %vm33 = vcmp.lt.s32.totalorder %v25, %v31
    %vm34 = vmand %vm29, %vm32
    %vm35 = vmand %vm30, %vm33
    %v36 = vsel %vm34, 1, 0
    %v37 = vsel %vm35, 1, 0
    %v38 = vcvt.s32.f32 %v36
    %v39 = vcvt.s32.f32 %v37
    %v40 = vmul.u32 %v24, 2
    %vm41 = vcmp.ge.s32.totalorder %v27, %v40
    %v42 = vadd.s32 %v40, 2
    %vm43 = vcmp.lt.s32.totalorder %v27, %v42
    %vm44 = vmand %vm41, %vm43
    %v45 = vsel %vm44, 1, 0
    %v46 = vcvt.s32.f32 %v45
    loop: start=0, step=1, limit=4
    $region10: #{tpu_custom_call.1} parent=1 // loop_pre_header
      _
    $region11: #{tpu_custom_call.1} parent=1 // loop_header
      %s48 = sphi 0, %s52
      %p49 = scmp.ge.s32.totalorder %s48, 4
      %v53 = vphi 0.0, %v63
      %v54 = vphi 0.0, %v64
    $region12: #{tpu_custom_call.1} parent=1 // loop_header_branch
      %51 = sbr.rel (%p49) target = $region16
    $region13: #{tpu_custom_call.1} parent=1 // loop_body
      %s55 = smul.u32 %s48, 16
      %s56 = scalar_lea.vmem [#allocation2], %s55
      %v57 = vld [vmem:[%s56] sm:$0xff]
      %v58 = vld [vmem:[%s56 + $0x8] sm:$0xff]
      %v59 = vmul.f32 %v57, 1.442695
      %v60 = vpow.pop %v59
      %v61 = vmul.f32 %v58, 1.442695
      %v62 = vpow.pop %v61
      %v63 = vadd.f32 %v53, %v60
      %v64 = vadd.f32 %v54, %v62
    $region14: #{tpu_custom_call.1} parent=1 // loop_footer
      %s52 = sadd.s32 1, %s48
    $region15: #{tpu_custom_call.1} parent=1 // loop_footer_branch
      %47 = sbr.rel target = $region11
    $region16: #{tpu_custom_call.1} parent=1 // loop_exit
      _
    %vm65 = vcmask 130048
    %v67 = vsel %vm65, %v53, 0
    %v70 = vsel %vm65, %v54, 0
    %72 = vmatprep.subr.mxu0 0.0
    %73 = vmatpush1.msra.mxu0 %v38
    %74 = vmatprep.subr.mxu0 0.0
    %75 = vmatpush1.msra.mxu0 %v39
    %76 = vmatprep.subr.mxu0 0.0
    %77 = vmatpush1.msra.mxu0 0.0
    %78 = vmatprep.subr.mxu0 0.0
    %79 = vmatpush1.msra.mxu0 0.0
    %80 = vmatprep.subr.mxu0 0.0
    %81 = vmatpush1.msra.mxu0 0.0
    %82 = vmatprep.subr.mxu0 0.0
    %83 = vmatpush1.msra.mxu0 0.0
    %84 = vmatprep.subr.mxu0 0.0
    %85 = vmatpush1.msra.mxu0 0.0
    %86 = vmatprep.subr.mxu0 0.0
    %87 = vmatpush1.msra.mxu0 0.0
    %88 = vmatprep.subr.mxu0 0.0
    %89 = vmatpush1.msra.mxu0 0.0
    %90 = vmatprep.subr.mxu0 0.0
    %91 = vmatpush1.msra.mxu0 0.0
    %92 = vmatprep.subr.mxu0 0.0
    %93 = vmatpush1.msra.mxu0 0.0
    %94 = vmatprep.subr.mxu0 0.0
    %95 = vmatpush1.msra.mxu0 0.0
    %96 = vmatprep.subr.mxu0 0.0
    %97 = vmatpush1.msra.mxu0 0.0
    %98 = vmatprep.subr.mxu0 0.0
    %99 = vmatpush1.msra.mxu0 0.0
    %100 = vmatprep.subr.mxu0 0.0
    %101 = vmatpush1.msra.mxu0 0.0
    %102 = vmatprep.subr.mxu0 0.0
    %103 = vmatpush1.msra.mxu0 0.0
    %104 = vmatprep.subr.mxu0 0.0
    %105 = vmatpush1.msra.mxu0 0.0
    %106 = vmatprep.subr.mxu0 0.0
    %107 = vmatpush1.msra.mxu0 0.0
    %108 = vmatprep.subr.mxu0 0.0
    %109 = vmatpush1.msra.mxu0 0.0
    %110 = vmatprep.subr.mxu0 0.0
    %111 = vmatpush1.msra.mxu0 0.0
    %112 = vmatprep.subr.mxu0 0.0
    %113 = vmatpush1.msra.mxu0 0.0
    %114 = vmatprep.subr.mxu0 0.0
    %115 = vmatpush1.msra.mxu0 0.0
    %116 = vmatprep.subr.mxu0 0.0
    %117 = vmatpush1.msra.mxu0 0.0
    %118 = vmatprep.subr.mxu0 0.0
    %119 = vmatpush1.msra.mxu0 0.0
    %120 = vmatprep.subr.mxu0 0.0
    %121 = vmatpush1.msra.mxu0 0.0
    %122 = vmatprep.subr.mxu0 0.0
    %123 = vmatpush1.msra.mxu0 0.0
    %124 = vmatprep.subr.mxu0 0.0
    %125 = vmatpush1.msra.mxu0 0.0
    %126 = vmatprep.subr.mxu0 0.0
    %127 = vmatpush1.msra.mxu0 0.0
    %128 = vmatprep.subr.mxu0 0.0
    %129 = vmatpush1.msra.mxu0 0.0
    %130 = vmatprep.subr.mxu0 0.0
    %131 = vmatpush1.msra.mxu0 0.0
    %132 = vmatprep.subr.mxu0 0.0
    %133 = vmatpush1.msra.mxu0 0.0
    %134 = vmatprep.subr.mxu0 0.0
    %135 = vmatpush1.msra.mxu0 0.0
    %136 = vmatprep.mubr.f32.mxu0 0.0
    %137 = vmatmul.mubr.f32.gmra.mrb[0].mxu0 %v67
    %v138 = vpop.f32.mrb[0].mxu0
    %v139 = vadd.f32 0.0, %v138
    %v140 = vpop.f32.mrb[0].mxu0
    %141 = vmatprep.mubr.f32.mxu0 0.0
    %142 = vmatmul.mubr.f32.gmra.mrb[0].mxu0 %v70
    %v143 = vpop.f32.mrb[0].mxu0
    %v144 = vadd.f32 0.0, %v143
    %v145 = vpop.f32.mrb[0].mxu0
    %146 = vdwg.mxu0
    %v148 = vsel %vm65, %v46, 0
    %150 = vmatprep.subr.mxu0 0.0
    %151 = vmatpush1.msra.mxu0 %v139
    %152 = vmatprep.subr.mxu0 0.0
    %153 = vmatpush1.msra.mxu0 %v144
    %154 = vmatprep.subr.mxu0 0.0
    %155 = vmatpush1.msra.mxu0 0.0
    %156 = vmatprep.subr.mxu0 0.0
    %157 = vmatpush1.msra.mxu0 0.0
    %158 = vmatprep.subr.mxu0 0.0
    %159 = vmatpush1.msra.mxu0 0.0
    %160 = vmatprep.subr.mxu0 0.0
    %161 = vmatpush1.msra.mxu0 0.0
    %162 = vmatprep.subr.mxu0 0.0
    %163 = vmatpush1.msra.mxu0 0.0
    %164 = vmatprep.subr.mxu0 0.0
    %165 = vmatpush1.msra.mxu0 0.0
    %166 = vmatprep.subr.mxu0 0.0
    %167 = vmatpush1.msra.mxu0 0.0
    %168 = vmatprep.subr.mxu0 0.0
    %169 = vmatpush1.msra.mxu0 0.0
    %170 = vmatprep.subr.mxu0 0.0
    %171 = vmatpush1.msra.mxu0 0.0
    %172 = vmatprep.subr.mxu0 0.0
    %173 = vmatpush1.msra.mxu0 0.0
    %174 = vmatprep.subr.mxu0 0.0
    %175 = vmatpush1.msra.mxu0 0.0
    %176 = vmatprep.subr.mxu0 0.0
    %177 = vmatpush1.msra.mxu0 0.0
    %178 = vmatprep.subr.mxu0 0.0
    %179 = vmatpush1.msra.mxu0 0.0
    %180 = vmatprep.subr.mxu0 0.0
    %181 = vmatpush1.msra.mxu0 0.0
    %182 = vmatprep.subr.mxu0 0.0
    %183 = vmatpush1.msra.mxu0 0.0
    %184 = vmatprep.subr.mxu0 0.0
    %185 = vmatpush1.msra.mxu0 0.0
    %186 = vmatprep.subr.mxu0 0.0
    %187 = vmatpush1.msra.mxu0 0.0
    %188 = vmatprep.subr.mxu0 0.0
    %189 = vmatpush1.msra.mxu0 0.0
    %190 = vmatprep.subr.mxu0 0.0
    %191 = vmatpush1.msra.mxu0 0.0
    %192 = vmatprep.subr.mxu0 0.0
    %193 = vmatpush1.msra.mxu0 0.0
    %194 = vmatprep.subr.mxu0 0.0
    %195 = vmatpush1.msra.mxu0 0.0
    %196 = vmatprep.subr.mxu0 0.0
    %197 = vmatpush1.msra.mxu0 0.0
    %198 = vmatprep.subr.mxu0 0.0
    %199 = vmatpush1.msra.mxu0 0.0
    %200 = vmatprep.subr.mxu0 0.0
    %201 = vmatpush1.msra.mxu0 0.0
    %202 = vmatprep.subr.mxu0 0.0
    %203 = vmatpush1.msra.mxu0 0.0
    %204 = vmatprep.subr.mxu0 0.0
    %205 = vmatpush1.msra.mxu0 0.0
    %206 = vmatprep.subr.mxu0 0.0
    %207 = vmatpush1.msra.mxu0 0.0
    %208 = vmatprep.subr.mxu0 0.0
    %209 = vmatpush1.msra.mxu0 0.0
    %210 = vmatprep.subr.mxu0 0.0
    %211 = vmatpush1.msra.mxu0 0.0
    %212 = vmatprep.subr.mxu0 0.0
    %213 = vmatpush1.msra.mxu0 0.0
    %214 = vmatprep.mubr.f32.mxu0 0.0
    %215 = vmatmul.mubr.f32.gmra.mrb[0].mxu0 %v148
    %v216 = vpop.f32.mrb[0].mxu0
    %v217 = vadd.f32 0.0, %v216
    %v218 = vpop.f32.mrb[0].mxu0
    %219 = vdwg.mxu0
    %v220 = vrcp.pop %v217
    %v221 = vmul.f32 %v217, %v220
    %v222 = vsub.f32 2.0, %v221
    %v223 = vmul.f32 %v220, %v222
    loop: start=0, step=1, limit=4
    $region17: #{tpu_custom_call.1} parent=1 // loop_pre_header
      _
    $region18: #{tpu_custom_call.1} parent=1 // loop_header
      %s225 = sphi 0, %s229
      %p226 = scmp.ge.s32.totalorder %s225, 4
    $region19: #{tpu_custom_call.1} parent=1 // loop_header_branch
      %228 = sbr.rel (%p226) target = $region23
    $region20: #{tpu_custom_call.1} parent=1 // loop_body
      %s230 = smul.u32 %s225, 16
      %s231 = scalar_lea.vmem [#allocation2], %s230
      %v232 = vld [vmem:[%s231] sm:$0xff]
      %v233 = vld [vmem:[%s231 + $0x8] sm:$0xff]
      %v234 = vmul.f32 %v232, %v53
      %v235 = vmul.f32 %v233, %v54
      %v237 = vsel %vm65, %v234, 0
      %v240 = vsel %vm65, %v235, 0
      %242 = vmatprep.subr.mxu0 0.0
      %243 = vmatpush1.msra.mxu0 %v38
      %244 = vmatprep.subr.mxu0 0.0
      %245 = vmatpush1.msra.mxu0 %v39
      %246 = vmatprep.subr.mxu0 0.0
      %247 = vmatpush1.msra.mxu0 0.0
      %248 = vmatprep.subr.mxu0 0.0
      %249 = vmatpush1.msra.mxu0 0.0
      %250 = vmatprep.subr.mxu0 0.0
      %251 = vmatpush1.msra.mxu0 0.0
      %252 = vmatprep.subr.mxu0 0.0
      %253 = vmatpush1.msra.mxu0 0.0
      %254 = vmatprep.subr.mxu0 0.0
      %255 = vmatpush1.msra.mxu0 0.0
      %256 = vmatprep.subr.mxu0 0.0
      %257 = vmatpush1.msra.mxu0 0.0
      %258 = vmatprep.subr.mxu0 0.0
      %259 = vmatpush1.msra.mxu0 0.0
      %260 = vmatprep.subr.mxu0 0.0
      %261 = vmatpush1.msra.mxu0 0.0
      %262 = vmatprep.subr.mxu0 0.0
      %263 = vmatpush1.msra.mxu0 0.0
      %264 = vmatprep.subr.mxu0 0.0
      %265 = vmatpush1.msra.mxu0 0.0
      %266 = vmatprep.subr.mxu0 0.0
      %267 = vmatpush1.msra.mxu0 0.0
      %268 = vmatprep.subr.mxu0 0.0
      %269 = vmatpush1.msra.mxu0 0.0
      %270 = vmatprep.subr.mxu0 0.0
      %271 = vmatpush1.msra.mxu0 0.0
      %272 = vmatprep.subr.mxu0 0.0
      %273 = vmatpush1.msra.mxu0 0.0
      %274 = vmatprep.subr.mxu0 0.0
      %275 = vmatpush1.msra.mxu0 0.0
      %276 = vmatprep.subr.mxu0 0.0
      %277 = vmatpush1.msra.mxu0 0.0
      %278 = vmatprep.subr.mxu0 0.0
      %279 = vmatpush1.msra.mxu0 0.0
      %280 = vmatprep.subr.mxu0 0.0
      %281 = vmatpush1.msra.mxu0 0.0
      %282 = vmatprep.subr.mxu0 0.0
      %283 = vmatpush1.msra.mxu0 0.0
      %284 = vmatprep.subr.mxu0 0.0
      %285 = vmatpush1.msra.mxu0 0.0
      %286 = vmatprep.subr.mxu0 0.0
      %287 = vmatpush1.msra.mxu0 0.0
      %288 = vmatprep.subr.mxu0 0.0
      %289 = vmatpush1.msra.mxu0 0.0
      %290 = vmatprep.subr.mxu0 0.0
      %291 = vmatpush1.msra.mxu0 0.0
      %292 = vmatprep.subr.mxu0 0.0
      %293 = vmatpush1.msra.mxu0 0.0
      %294 = vmatprep.subr.mxu0 0.0
      %295 = vmatpush1.msra.mxu0 0.0
      %296 = vmatprep.subr.mxu0 0.0
      %297 = vmatpush1.msra.mxu0 0.0
      %298 = vmatprep.subr.mxu0 0.0
      %299 = vmatpush1.msra.mxu0 0.0
      %300 = vmatprep.subr.mxu0 0.0
      %301 = vmatpush1.msra.mxu0 0.0
      %302 = vmatprep.subr.mxu0 0.0
      %303 = vmatpush1.msra.mxu0 0.0
      %304 = vmatprep.subr.mxu0 0.0
      %305 = vmatpush1.msra.mxu0 0.0
      %306 = vmatprep.mubr.f32.mxu0 0.0
      %307 = vmatmul.mubr.f32.gmra.mrb[0].mxu0 %v237
      %v308 = vpop.f32.mrb[0].mxu0
      %v309 = vadd.f32 0.0, %v308
      %v310 = vpop.f32.mrb[0].mxu0
      %311 = vmatprep.mubr.f32.mxu0 0.0
      %312 = vmatmul.mubr.f32.gmra.mrb[0].mxu0 %v240
      %v313 = vpop.f32.mrb[0].mxu0
      %v314 = vadd.f32 0.0, %v313
      %v315 = vpop.f32.mrb[0].mxu0
      %316 = vdwg.mxu0
      %317 = vmatprep.subr.mxu0 0.0
      %318 = vmatpush1.msra.mxu0 %v309
      %319 = vmatprep.subr.mxu0 0.0
      %320 = vmatpush1.msra.mxu0 %v314
      %321 = vmatprep.subr.mxu0 0.0
      %322 = vmatpush1.msra.mxu0 0.0
      %323 = vmatprep.subr.mxu0 0.0
      %324 = vmatpush1.msra.mxu0 0.0
      %325 = vmatprep.subr.mxu0 0.0
      %326 = vmatpush1.msra.mxu0 0.0
      %327 = vmatprep.subr.mxu0 0.0
      %328 = vmatpush1.msra.mxu0 0.0
      %329 = vmatprep.subr.mxu0 0.0
      %330 = vmatpush1.msra.mxu0 0.0
      %331 = vmatprep.subr.mxu0 0.0
      %332 = vmatpush1.msra.mxu0 0.0
      %333 = vmatprep.subr.mxu0 0.0
      %334 = vmatpush1.msra.mxu0 0.0
      %335 = vmatprep.subr.mxu0 0.0
      %336 = vmatpush1.msra.mxu0 0.0
      %337 = vmatprep.subr.mxu0 0.0
      %338 = vmatpush1.msra.mxu0 0.0
      %339 = vmatprep.subr.mxu0 0.0
      %340 = vmatpush1.msra.mxu0 0.0
      %341 = vmatprep.subr.mxu0 0.0
      %342 = vmatpush1.msra.mxu0 0.0
      %343 = vmatprep.subr.mxu0 0.0
      %344 = vmatpush1.msra.mxu0 0.0
      %345 = vmatprep.subr.mxu0 0.0
      %346 = vmatpush1.msra.mxu0 0.0
      %347 = vmatprep.subr.mxu0 0.0
      %348 = vmatpush1.msra.mxu0 0.0
      %349 = vmatprep.subr.mxu0 0.0
      %350 = vmatpush1.msra.mxu0 0.0
      %351 = vmatprep.subr.mxu0 0.0
      %352 = vmatpush1.msra.mxu0 0.0
      %353 = vmatprep.subr.mxu0 0.0
      %354 = vmatpush1.msra.mxu0 0.0
      %355 = vmatprep.subr.mxu0 0.0
      %356 = vmatpush1.msra.mxu0 0.0
      %357 = vmatprep.subr.mxu0 0.0
      %358 = vmatpush1.msra.mxu0 0.0
      %359 = vmatprep.subr.mxu0 0.0
      %360 = vmatpush1.msra.mxu0 0.0
      %361 = vmatprep.subr.mxu0 0.0
      %362 = vmatpush1.msra.mxu0 0.0
      %363 = vmatprep.subr.mxu0 0.0
      %364 = vmatpush1.msra.mxu0 0.0
      %365 = vmatprep.subr.mxu0 0.0
      %366 = vmatpush1.msra.mxu0 0.0
      %367 = vmatprep.subr.mxu0 0.0
      %368 = vmatpush1.msra.mxu0 0.0
      %369 = vmatprep.subr.mxu0 0.0
      %370 = vmatpush1.msra.mxu0 0.0
      %371 = vmatprep.subr.mxu0 0.0
      %372 = vmatpush1.msra.mxu0 0.0
      %373 = vmatprep.subr.mxu0 0.0
      %374 = vmatpush1.msra.mxu0 0.0
      %375 = vmatprep.subr.mxu0 0.0
      %376 = vmatpush1.msra.mxu0 0.0
      %377 = vmatprep.subr.mxu0 0.0
      %378 = vmatpush1.msra.mxu0 0.0
      %379 = vmatprep.subr.mxu0 0.0
      %380 = vmatpush1.msra.mxu0 0.0
      %381 = vmatprep.mubr.f32.mxu0 0.0
      %382 = vmatmul.mubr.f32.gmra.mrb[0].mxu0 %v148
      %v383 = vpop.f32.mrb[0].mxu0
      %v384 = vadd.f32 0.0, %v383
      %v385 = vpop.f32.mrb[0].mxu0
      %386 = vdwg.mxu0
      %v387 = vmul.f32 %v384, %v223
      %s388 = smul.u32 %s225, 8
      %s389 = scalar_lea.vmem [#allocation5], %s388
      %vm390 = vcmask 64512
      %391 = vst.msk [vmem:[%s389] sm:$0xff] %vm390, %v387
    $region21: #{tpu_custom_call.1} parent=1 // loop_footer
      %s229 = sadd.s32 1, %s225
    $region22: #{tpu_custom_call.1} parent=1 // loop_footer_branch
      %224 = sbr.rel target = $region18
    $region23: #{tpu_custom_call.1} parent=1 // loop_exit
      _
    loop: start=0, step=1, limit=4
    $region24: #{tpu_custom_call.1} parent=1 // loop_pre_header
      _
    $region25: #{tpu_custom_call.1} parent=1 // loop_header
      %s393 = sphi 0, %s397
      %p394 = scmp.ge.s32.totalorder %s393, 4
      %v398 = vphi 0.0, %v409
      %v399 = vphi 0.0, %v410
    $region26: #{tpu_custom_call.1} parent=1 // loop_header_branch
      %396 = sbr.rel (%p394) target = $region30
    $region27: #{tpu_custom_call.1} parent=1 // loop_body
      %s400 = smul.u32 %s393, 16
      %s401 = sadd.s32 %s400, 64
      %s402 = scalar_lea.vmem [#allocation2], %s401
      %v403 = vld [vmem:[%s402] sm:$0xff]
      %v404 = vld [vmem:[%s402 + $0x8] sm:$0xff]
      %v405 = vmul.f32 %v403, 1.442695
      %v406 = vpow.pop %v405
      %v407 = vmul.f32 %v404, 1.442695
      %v408 = vpow.pop %v407
      %v409 = vadd.f32 %v398, %v406
      %v410 = vadd.f32 %v399, %v408
    $region28: #{tpu_custom_call.1} parent=1 // loop_footer
      %s397 = sadd.s32 1, %s393
    $region29: #{tpu_custom_call.1} parent=1 // loop_footer_branch
      %392 = sbr.rel target = $region25
    $region30: #{tpu_custom_call.1} parent=1 // loop_exit
      _
    %v412 = vsel %vm65, %v398, 0
    %v415 = vsel %vm65, %v399, 0
    %417 = vmatprep.subr.mxu0 0.0
    %418 = vmatpush1.msra.mxu0 %v38
    %419 = vmatprep.subr.mxu0 0.0
    %420 = vmatpush1.msra.mxu0 %v39
    %421 = vmatprep.subr.mxu0 0.0
    %422 = vmatpush1.msra.mxu0 0.0
    %423 = vmatprep.subr.mxu0 0.0
    %424 = vmatpush1.msra.mxu0 0.0
    %425 = vmatprep.subr.mxu0 0.0
    %426 = vmatpush1.msra.mxu0 0.0
    %427 = vmatprep.subr.mxu0 0.0
    %428 = vmatpush1.msra.mxu0 0.0
    %429 = vmatprep.subr.mxu0 0.0
    %430 = vmatpush1.msra.mxu0 0.0
    %431 = vmatprep.subr.mxu0 0.0
    %432 = vmatpush1.msra.mxu0 0.0
    %433 = vmatprep.subr.mxu0 0.0
    %434 = vmatpush1.msra.mxu0 0.0
    %435 = vmatprep.subr.mxu0 0.0
    %436 = vmatpush1.msra.mxu0 0.0
    %437 = vmatprep.subr.mxu0 0.0
    %438 = vmatpush1.msra.mxu0 0.0
    %439 = vmatprep.subr.mxu0 0.0
    %440 = vmatpush1.msra.mxu0 0.0
    %441 = vmatprep.subr.mxu0 0.0
    %442 = vmatpush1.msra.mxu0 0.0
    %443 = vmatprep.subr.mxu0 0.0
    %444 = vmatpush1.msra.mxu0 0.0
    %445 = vmatprep.subr.mxu0 0.0
    %446 = vmatpush1.msra.mxu0 0.0
    %447 = vmatprep.subr.mxu0 0.0
    %448 = vmatpush1.msra.mxu0 0.0
    %449 = vmatprep.subr.mxu0 0.0
    %450 = vmatpush1.msra.mxu0 0.0
    %451 = vmatprep.subr.mxu0 0.0
    %452 = vmatpush1.msra.mxu0 0.0
    %453 = vmatprep.subr.mxu0 0.0
    %454 = vmatpush1.msra.mxu0 0.0
    %455 = vmatprep.subr.mxu0 0.0
    %456 = vmatpush1.msra.mxu0 0.0
    %457 = vmatprep.subr.mxu0 0.0
    %458 = vmatpush1.msra.mxu0 0.0
    %459 = vmatprep.subr.mxu0 0.0
    %460 = vmatpush1.msra.mxu0 0.0
    %461 = vmatprep.subr.mxu0 0.0
    %462 = vmatpush1.msra.mxu0 0.0
    %463 = vmatprep.subr.mxu0 0.0
    %464 = vmatpush1.msra.mxu0 0.0
    %465 = vmatprep.subr.mxu0 0.0
    %466 = vmatpush1.msra.mxu0 0.0
    %467 = vmatprep.subr.mxu0 0.0
    %468 = vmatpush1.msra.mxu0 0.0
    %469 = vmatprep.subr.mxu0 0.0
    %470 = vmatpush1.msra.mxu0 0.0
    %471 = vmatprep.subr.mxu0 0.0
    %472 = vmatpush1.msra.mxu0 0.0
    %473 = vmatprep.subr.mxu0 0.0
    %474 = vmatpush1.msra.mxu0 0.0
    %475 = vmatprep.subr.mxu0 0.0
    %476 = vmatpush1.msra.mxu0 0.0
    %477 = vmatprep.subr.mxu0 0.0
    %478 = vmatpush1.msra.mxu0 0.0
    %479 = vmatprep.subr.mxu0 0.0
    %480 = vmatpush1.msra.mxu0 0.0
    %481 = vmatprep.mubr.f32.mxu0 0.0
    %482 = vmatmul.mubr.f32.gmra.mrb[0].mxu0 %v412
    %v483 = vpop.f32.mrb[0].mxu0
    %v484 = vadd.f32 0.0, %v483
    %v485 = vpop.f32.mrb[0].mxu0
    %486 = vmatprep.mubr.f32.mxu0 0.0
    %487 = vmatmul.mubr.f32.gmra.mrb[0].mxu0 %v415
    %v488 = vpop.f32.mrb[0].mxu0
    %v489 = vadd.f32 0.0, %v488
    %v490 = vpop.f32.mrb[0].mxu0
    %491 = vdwg.mxu0
    %492 = vmatprep.subr.mxu0 0.0
    %493 = vmatpush1.msra.mxu0 %v484
    %494 = vmatprep.subr.mxu0 0.0
    %495 = vmatpush1.msra.mxu0 %v489
    %496 = vmatprep.subr.mxu0 0.0
    %497 = vmatpush1.msra.mxu0 0.0
    %498 = vmatprep.subr.mxu0 0.0
    %499 = vmatpush1.msra.mxu0 0.0
    %500 = vmatprep.subr.mxu0 0.0
    %501 = vmatpush1.msra.mxu0 0.0
    %502 = vmatprep.subr.mxu0 0.0
    %503 = vmatpush1.msra.mxu0 0.0
    %504 = vmatprep.subr.mxu0 0.0
    %505 = vmatpush1.msra.mxu0 0.0
    %506 = vmatprep.subr.mxu0 0.0
    %507 = vmatpush1.msra.mxu0 0.0
    %508 = vmatprep.subr.mxu0 0.0
    %509 = vmatpush1.msra.mxu0 0.0
    %510 = vmatprep.subr.mxu0 0.0
    %511 = vmatpush1.msra.mxu0 0.0
    %512 = vmatprep.subr.mxu0 0.0
    %513 = vmatpush1.msra.mxu0 0.0
    %514 = vmatprep.subr.mxu0 0.0
    %515 = vmatpush1.msra.mxu0 0.0
    %516 = vmatprep.subr.mxu0 0.0
    %517 = vmatpush1.msra.mxu0 0.0
    %518 = vmatprep.subr.mxu0 0.0
    %519 = vmatpush1.msra.mxu0 0.0
    %520 = vmatprep.subr.mxu0 0.0
    %521 = vmatpush1.msra.mxu0 0.0
    %522 = vmatprep.subr.mxu0 0.0
    %523 = vmatpush1.msra.mxu0 0.0
    %524 = vmatprep.subr.mxu0 0.0
    %525 = vmatpush1.msra.mxu0 0.0
    %526 = vmatprep.subr.mxu0 0.0
    %527 = vmatpush1.msra.mxu0 0.0
    %528 = vmatprep.subr.mxu0 0.0
    %529 = vmatpush1.msra.mxu0 0.0
    %530 = vmatprep.subr.mxu0 0.0
    %531 = vmatpush1.msra.mxu0 0.0
    %532 = vmatprep.subr.mxu0 0.0
    %533 = vmatpush1.msra.mxu0 0.0
    %534 = vmatprep.subr.mxu0 0.0
    %535 = vmatpush1.msra.mxu0 0.0
    %536 = vmatprep.subr.mxu0 0.0
    %537 = vmatpush1.msra.mxu0 0.0
    %538 = vmatprep.subr.mxu0 0.0
    %539 = vmatpush1.msra.mxu0 0.0
    %540 = vmatprep.subr.mxu0 0.0
    %541 = vmatpush1.msra.mxu0 0.0
    %542 = vmatprep.subr.mxu0 0.0
    %543 = vmatpush1.msra.mxu0 0.0
    %544 = vmatprep.subr.mxu0 0.0
    %545 = vmatpush1.msra.mxu0 0.0
    %546 = vmatprep.subr.mxu0 0.0
    %547 = vmatpush1.msra.mxu0 0.0
    %548 = vmatprep.subr.mxu0 0.0
    %549 = vmatpush1.msra.mxu0 0.0
    %550 = vmatprep.subr.mxu0 0.0
    %551 = vmatpush1.msra.mxu0 0.0
    %552 = vmatprep.subr.mxu0 0.0
    %553 = vmatpush1.msra.mxu0 0.0
    %554 = vmatprep.subr.mxu0 0.0
    %555 = vmatpush1.msra.mxu0 0.0
    %556 = vmatprep.mubr.f32.mxu0 0.0
    %557 = vmatmul.mubr.f32.gmra.mrb[0].mxu0 %v148
    %v558 = vpop.f32.mrb[0].mxu0
    %v559 = vadd.f32 0.0, %v558
    %v560 = vpop.f32.mrb[0].mxu0
    %561 = vdwg.mxu0
    %v562 = vrcp.pop %v559
    %v563 = vmul.f32 %v559, %v562
    %v564 = vsub.f32 2.0, %v563
    %v565 = vmul.f32 %v562, %v564
    loop: start=0, step=1, limit=4
    $region31: #{tpu_custom_call.1} parent=1 // loop_pre_header
      _
    $region32: #{tpu_custom_call.1} parent=1 // loop_header
      %s567 = sphi 0, %s571
      %p568 = scmp.ge.s32.totalorder %s567, 4
    $region33: #{tpu_custom_call.1} parent=1 // loop_header_branch
      %570 = sbr.rel (%p568) target = $region37
    $region34: #{tpu_custom_call.1} parent=1 // loop_body
      %s572 = smul.u32 %s567, 16
      %s573 = sadd.s32 %s572, 64
      %s574 = scalar_lea.vmem [#allocation2], %s573
      %v575 = vld [vmem:[%s574] sm:$0xff]
      %v576 = vld [vmem:[%s574 + $0x8] sm:$0xff]
      %v577 = vmul.f32 %v575, %v398
      %v578 = vmul.f32 %v576, %v399
      %v580 = vsel %vm65, %v577, 0
      %v583 = vsel %vm65, %v578, 0
      %585 = vmatprep.subr.mxu0 0.0
      %586 = vmatpush1.msra.mxu0 %v38
      %587 = vmatprep.subr.mxu0 0.0
      %588 = vmatpush1.msra.mxu0 %v39
      %589 = vmatprep.subr.mxu0 0.0
      %590 = vmatpush1.msra.mxu0 0.0
      %591 = vmatprep.subr.mxu0 0.0
      %592 = vmatpush1.msra.mxu0 0.0
      %593 = vmatprep.subr.mxu0 0.0
      %594 = vmatpush1.msra.mxu0 0.0
      %595 = vmatprep.subr.mxu0 0.0
      %596 = vmatpush1.msra.mxu0 0.0
      %597 = vmatprep.subr.mxu0 0.0
      %598 = vmatpush1.msra.mxu0 0.0
      %599 = vmatprep.subr.mxu0 0.0
      %600 = vmatpush1.msra.mxu0 0.0
      %601 = vmatprep.subr.mxu0 0.0
      %602 = vmatpush1.msra.mxu0 0.0
      %603 = vmatprep.subr.mxu0 0.0
      %604 = vmatpush1.msra.mxu0 0.0
      %605 = vmatprep.subr.mxu0 0.0
      %606 = vmatpush1.msra.mxu0 0.0
      %607 = vmatprep.subr.mxu0 0.0
      %608 = vmatpush1.msra.mxu0 0.0
      %609 = vmatprep.subr.mxu0 0.0
      %610 = vmatpush1.msra.mxu0 0.0
      %611 = vmatprep.subr.mxu0 0.0
      %612 = vmatpush1.msra.mxu0 0.0
      %613 = vmatprep.subr.mxu0 0.0
      %614 = vmatpush1.msra.mxu0 0.0
      %615 = vmatprep.subr.mxu0 0.0
      %616 = vmatpush1.msra.mxu0 0.0
      %617 = vmatprep.subr.mxu0 0.0
      %618 = vmatpush1.msra.mxu0 0.0
      %619 = vmatprep.subr.mxu0 0.0
      %620 = vmatpush1.msra.mxu0 0.0
      %621 = vmatprep.subr.mxu0 0.0
      %622 = vmatpush1.msra.mxu0 0.0
      %623 = vmatprep.subr.mxu0 0.0
      %624 = vmatpush1.msra.mxu0 0.0
      %625 = vmatprep.subr.mxu0 0.0
      %626 = vmatpush1.msra.mxu0 0.0
      %627 = vmatprep.subr.mxu0 0.0
      %628 = vmatpush1.msra.mxu0 0.0
      %629 = vmatprep.subr.mxu0 0.0
      %630 = vmatpush1.msra.mxu0 0.0
      %631 = vmatprep.subr.mxu0 0.0
      %632 = vmatpush1.msra.mxu0 0.0
      %633 = vmatprep.subr.mxu0 0.0
      %634 = vmatpush1.msra.mxu0 0.0
      %635 = vmatprep.subr.mxu0 0.0
      %636 = vmatpush1.msra.mxu0 0.0
      %637 = vmatprep.subr.mxu0 0.0
      %638 = vmatpush1.msra.mxu0 0.0
      %639 = vmatprep.subr.mxu0 0.0
      %640 = vmatpush1.msra.mxu0 0.0
      %641 = vmatprep.subr.mxu0 0.0
      %642 = vmatpush1.msra.mxu0 0.0
      %643 = vmatprep.subr.mxu0 0.0
      %644 = vmatpush1.msra.mxu0 0.0
      %645 = vmatprep.subr.mxu0 0.0
      %646 = vmatpush1.msra.mxu0 0.0
      %647 = vmatprep.subr.mxu0 0.0
      %648 = vmatpush1.msra.mxu0 0.0
      %649 = vmatprep.mubr.f32.mxu0 0.0
      %650 = vmatmul.mubr.f32.gmra.mrb[0].mxu0 %v580
      %v651 = vpop.f32.mrb[0].mxu0
      %v652 = vadd.f32 0.0, %v651
      %v653 = vpop.f32.mrb[0].mxu0
      %654 = vmatprep.mubr.f32.mxu0 0.0
      %655 = vmatmul.mubr.f32.gmra.mrb[0].mxu0 %v583
      %v656 = vpop.f32.mrb[0].mxu0
      %v657 = vadd.f32 0.0, %v656
      %v658 = vpop.f32.mrb[0].mxu0
      %659 = vdwg.mxu0
      %660 = vmatprep.subr.mxu0 0.0
      %661 = vmatpush1.msra.mxu0 %v652
      %662 = vmatprep.subr.mxu0 0.0
      %663 = vmatpush1.msra.mxu0 %v657
      %664 = vmatprep.subr.mxu0 0.0
      %665 = vmatpush1.msra.mxu0 0.0
      %666 = vmatprep.subr.mxu0 0.0
      %667 = vmatpush1.msra.mxu0 0.0
      %668 = vmatprep.subr.mxu0 0.0
      %669 = vmatpush1.msra.mxu0 0.0
      %670 = vmatprep.subr.mxu0 0.0
      %671 = vmatpush1.msra.mxu0 0.0
      %672 = vmatprep.subr.mxu0 0.0
      %673 = vmatpush1.msra.mxu0 0.0
      %674 = vmatprep.subr.mxu0 0.0
      %675 = vmatpush1.msra.mxu0 0.0
      %676 = vmatprep.subr.mxu0 0.0
      %677 = vmatpush1.msra.mxu0 0.0
      %678 = vmatprep.subr.mxu0 0.0
      %679 = vmatpush1.msra.mxu0 0.0
      %680 = vmatprep.subr.mxu0 0.0
      %681 = vmatpush1.msra.mxu0 0.0
      %682 = vmatprep.subr.mxu0 0.0
      %683 = vmatpush1.msra.mxu0 0.0
      %684 = vmatprep.subr.mxu0 0.0
      %685 = vmatpush1.msra.mxu0 0.0
      %686 = vmatprep.subr.mxu0 0.0
      %687 = vmatpush1.msra.mxu0 0.0
      %688 = vmatprep.subr.mxu0 0.0
      %689 = vmatpush1.msra.mxu0 0.0
      %690 = vmatprep.subr.mxu0 0.0
      %691 = vmatpush1.msra.mxu0 0.0
      %692 = vmatprep.subr.mxu0 0.0
      %693 = vmatpush1.msra.mxu0 0.0
      %694 = vmatprep.subr.mxu0 0.0
      %695 = vmatpush1.msra.mxu0 0.0
      %696 = vmatprep.subr.mxu0 0.0
      %697 = vmatpush1.msra.mxu0 0.0
      %698 = vmatprep.subr.mxu0 0.0
      %699 = vmatpush1.msra.mxu0 0.0
      %700 = vmatprep.subr.mxu0 0.0
      %701 = vmatpush1.msra.mxu0 0.0
      %702 = vmatprep.subr.mxu0 0.0
      %703 = vmatpush1.msra.mxu0 0.0
      %704 = vmatprep.subr.mxu0 0.0
      %705 = vmatpush1.msra.mxu0 0.0
      %706 = vmatprep.subr.mxu0 0.0
      %707 = vmatpush1.msra.mxu0 0.0
      %708 = vmatprep.subr.mxu0 0.0
      %709 = vmatpush1.msra.mxu0 0.0
      %710 = vmatprep.subr.mxu0 0.0
      %711 = vmatpush1.msra.mxu0 0.0
      %712 = vmatprep.subr.mxu0 0.0
      %713 = vmatpush1.msra.mxu0 0.0
      %714 = vmatprep.subr.mxu0 0.0
      %715 = vmatpush1.msra.mxu0 0.0
      %716 = vmatprep.subr.mxu0 0.0
      %717 = vmatpush1.msra.mxu0 0.0
      %718 = vmatprep.subr.mxu0 0.0
      %719 = vmatpush1.msra.mxu0 0.0
      %720 = vmatprep.subr.mxu0 0.0
      %721 = vmatpush1.msra.mxu0 0.0
      %722 = vmatprep.subr.mxu0 0.0
      %723 = vmatpush1.msra.mxu0 0.0
      %724 = vmatprep.mubr.f32.mxu0 0.0
      %725 = vmatmul.mubr.f32.gmra.mrb[0].mxu0 %v148
      %v726 = vpop.f32.mrb[0].mxu0
      %v727 = vadd.f32 0.0, %v726
      %v728 = vpop.f32.mrb[0].mxu0
      %729 = vdwg.mxu0
      %v730 = vmul.f32 %v727, %v565
      %s731 = smul.u32 %s567, 8
      %s732 = sadd.s32 %s731, 32
      %s733 = scalar_lea.vmem [#allocation5], %s732
      %vm734 = vcmask 64512
      %735 = vst.msk [vmem:[%s733] sm:$0xff] %vm734, %v730
    $region35: #{tpu_custom_call.1} parent=1 // loop_footer
      %s571 = sadd.s32 1, %s567
    $region36: #{tpu_custom_call.1} parent=1 // loop_footer_branch
      %566 = sbr.rel target = $region32
    $region37: #{tpu_custom_call.1} parent=1 // loop_exit
      _
    // Predicated region
    $region38: #{tpu_custom_call.1} parent=1 // pred_check
      _
    $region39: #{tpu_custom_call.1} parent=1 // pred_check_branch
      %737 = sbr.rel (0) target = $region41
    $region40: #{tpu_custom_call.1} parent=1 // pred_region
      %s739 = ssub.s32 1024, 1024
      %740 = vsyncadd [#allocation4], %s739
      %s741 = sshll.u32 [#allocation5], 4
      %s742 = int_to_ptr.vmem [resolvable:$true] %s741
      %747 = dma.vmem_to_hbm [thread:$0]  %s742, 1024, %s1, [#allocation4], 128, 128, 8
    $region41: #{tpu_custom_call.1} parent=1 // pred_fallthru
      _
    // Predicated region
    $region42: #{tpu_custom_call.1} parent=1 // pred_check
      _
    $region43: #{tpu_custom_call.1} parent=1 // pred_check_branch
      %749 = sbr.rel (0) target = $region45
    $region44: #{tpu_custom_call.1} parent=1 // pred_region
      %750 = dma.done [#allocation4], 1024
    $region45: #{tpu_custom_call.1} parent=1 // pred_fallthru
      _
    %751 = vsyncpa [#allocation3], 1
    %752 = vsyncpa [#allocation4], 1

</llo_original>
